<compile_context>
chip_gen: v7x
topology: tpu7x:2x2x1
jax: 0.10.0
libtpu: 0.0.40
codegen_flags: <defaults>
</compile_context>

<pallas_src>
import math

import jax
import jax.numpy as jnp
from jax import lax
from jax.experimental import pallas as pl
from jax.experimental.pallas import tpu as pltpu


def _vmem_capacity_bytes():
    """Physical VMEM per TensorCore; conservative fallback if the query fails."""
    try:
        return int(pltpu.get_tpu_info().vmem_capacity_bytes)
    except Exception:
        return 64 << 20  # v7x per-TensorCore VMEM (smallest current generation)


def _sublane_multiple(*dtypes):
    """Dtype-aware sublane packing: 8 rows for 4-byte, 16 for 2-byte, 32 for 1-byte."""
    min_item = min(jnp.dtype(d).itemsize for d in dtypes)
    return max(8, 32 // max(1, min_item))


def _pick_batches_per_block(B, F, rows, bytes_per_batch, target_bytes, sub):
    """Largest batch fold Bb (divisor of B) such that block_rows = Bb*F
    (a) is a multiple of the dtype sublane packing, or covers all rows,
    (b) keeps the x block under the per-tile byte target when possible,
    (c) prefers >= 2 row blocks so 'parallel' axes shard across v7x's 2 TCs."""
    legal = [bb for bb in range(1, B + 1)
             if B % bb == 0 and ((bb * F) % sub == 0 or bb * F == rows)]
    if not legal:
        legal = [B]
    fits = [bb for bb in legal if bb * bytes_per_batch <= target_bytes]
    if fits:
        multi = [bb for bb in fits if B // bb >= 2]
        return max(multi) if multi else max(fits)
    return min(legal)


def _pick_col_chunk(L, block_rows, itemsize, target_bytes, min_chunks=1):
    """Lane-axis chunk Lc: the full extent if it fits, else the largest
    128-multiple under the byte budget.  Non-divisor chunks are fine: the grid
    uses pl.cdiv and Pallas masks the ragged last block."""
    full_bytes = block_rows * L * itemsize
    if full_bytes <= target_bytes and min_chunks <= 1:
        return L
    max_lc = max(128, (target_bytes // max(1, block_rows * itemsize)) // 128 * 128)
    if min_chunks > 1:
        max_lc = min(max_lc, max(128, pl.cdiv(L, min_chunks) // 128 * 128))
    lc = min(max_lc, L)
    if lc >= L:
        return L
    # Prefer an exact divisor (all blocks identical); otherwise the budgeted chunk.
    divs = [c for c in range(128, L, 128) if L % c == 0 and c <= lc]
    return max(divs) if divs else lc


def _make_add_kernel(block_rows, P, out_dtype):
    """out[r, :] = x[r, :] + emb[r % P, :] over a (block_rows, Lc) tile, where the
    small (P, Lc) embedding tile holds one sublane-aligned frame period and is
    broadcast across the folded batches with aligned P-row slices."""
    n_full = block_rows // P
    rem = block_rows - n_full * P

    def kernel(x_ref, emb_ref, o_ref):
        emb = emb_ref[...].astype(out_dtype)  # (P, Lc), stays resident

        def add_chunk(i):
            r0 = pl.multiple_of(i * P, P)
            o_ref[pl.ds(r0, P), :] = x_ref[pl.ds(r0, P), :].astype(out_dtype) + emb

        if n_full <= 8:
            for i in range(n_full):          # short: unroll for LLO visibility
                add_chunk(i)
        else:
            def body(i, carry):
                add_chunk(i)
                return carry
            lax.fori_loop(0, n_full, body, 0)

        if rem > 0:                           # full-extent block, rows % P != 0
            r0 = n_full * P
            o_ref[pl.ds(r0, rem), :] = (
                x_ref[pl.ds(r0, rem), :].astype(out_dtype) + emb[:rem, :])

    return kernel


def mp_temporal_embedding(x, embedding, gate=None, *, gated=False,
                          target_tile_bytes=None, donate_x=False):
    """Pallas implementation of MPTemporalEmbedding.forward.

    x:         [B, F, C, T, D]
    embedding: [num_frames, 1, 1, D]  (only the first F rows are used)
    gate:      [1] (required if gated=True)
    donate_x:  alias x into the output (only when dtypes match) to halve HBM footprint.
    """
    B, F, C, T, D = x.shape
    num_frames = embedding.shape[0]
    assert 1 <= F <= num_frames, "Input frames F has to be <= num_frames"
    assert embedding.shape == (num_frames, 1, 1, D)

    # Effective per-frame embedding [F, D]; gate folded in, natural dtype promotion.
    emb_eff = embedding[:F, 0, 0, :]
    if gated:
        assert gate is not None, "gated=True requires a gate parameter"
        emb_eff = jnp.tanh(gate) * emb_eff
    out_dtype = jnp.result_type(x.dtype, emb_eff.dtype)

    L = C * T * D
    rows = B * F
    x_item = jnp.dtype(x.dtype).itemsize
    out_item = jnp.dtype(out_dtype).itemsize
    emb_item = jnp.dtype(emb_eff.dtype).itemsize

    # --- Per-generation VMEM accounting ------------------------------------
    vmem_cap = _vmem_capacity_bytes()
    usable = max(16 << 20, vmem_cap - (8 << 20))          # headroom for internals
    auto_target = min(12 << 20, max(2 << 20, (usable - (4 << 20)) // 6))
    target = min(int(target_tile_bytes), auto_target) if target_tile_bytes else auto_target

    # --- Block shape selection ----------------------------------------------
    sub = _sublane_multiple(x.dtype, out_dtype)
    bytes_per_batch = F * L * x_item
    Bb = _pick_batches_per_block(B, F, rows, bytes_per_batch, target, sub)
    block_rows = Bb * F
    num_row_blocks = B // Bb
    Lc = _pick_col_chunk(L, block_rows, x_item, target)
    num_col_blocks = pl.cdiv(L, Lc)

    # Guarantee >= 2 grid steps for non-trivial inputs (v7x has 2 TensorCores).
    if (num_row_blocks * num_col_blocks == 1
            and rows * L * x_item >= (2 << 20) and L >= 256):
        Lc = _pick_col_chunk(L, block_rows, x_item, target, min_chunks=2)
        num_col_blocks = pl.cdiv(L, Lc)

    # --- Small resident embedding operand: one sublane-aligned frame period --
    P = (F * sub) // math.gcd(F, sub)          # lcm(F, sublane packing)
    P = min(P, rows)                           # tiny-input case (rows < lcm)
    reps = pl.cdiv(P, F)
    emb_fl = jnp.broadcast_to(emb_eff[:, None, :], (F, C * T, D)).reshape(F, L)
    emb2 = jnp.tile(emb_fl, (reps, 1))[:P] if reps > 1 else emb_fl

    # Lane-dense 2-D view of x.
    x2 = x.reshape(rows, L)

    # Grid: (lane chunks [outer], row blocks [inner, fastest]) -> emb block index
    # is constant along the inner axis, so it stays resident in VMEM.
    grid = (num_col_blocks, num_row_blocks)
    x_spec = pl.BlockSpec((block_rows, Lc), lambda j, i: (i, j))
    emb_spec = pl.BlockSpec((P, Lc), lambda j, i: (0, j))
    out_spec = pl.BlockSpec((block_rows, Lc), lambda j, i: (i, j))

    # Actual double-buffered need (x + out + small emb), capped below physical VMEM.
    x_blk = block_rows * Lc * x_item
    out_blk = block_rows * Lc * out_item
    emb_blk = P * Lc * emb_item
    need = 2 * (x_blk + out_blk + emb_blk) + (2 << 20)
    vmem_limit = int(min(max(need, 16 << 20), usable))

    io_aliases = {0: 0} if (donate_x and out_dtype == x.dtype) else {}

    out2 = pl.pallas_call(
        _make_add_kernel(block_rows, P, out_dtype),
        out_shape=jax.ShapeDtypeStruct((rows, L), out_dtype),
        grid=grid,
        in_specs=[x_spec, emb_spec],
        out_specs=out_spec,
        input_output_aliases=io_aliases,
        compiler_params=pltpu.CompilerParams(
            dimension_semantics=("parallel", "parallel"),
            vmem_limit_bytes=vmem_limit,
        ),
    )(x2, emb2)
    return out2.reshape(B, F, C, T, D)


def _reference(x, embedding, gate=None, gated=False):
    F = x.shape[1]
    emb = embedding[:F][None]  # [1, F, 1, 1, D]
    if gated:
        return x + jnp.tanh(gate) * emb
    return x + emb


if __name__ == "__main__":
    key = jax.random.PRNGKey(0)
    keys = jax.random.split(key, 8)

    def check(got, want, tol=1e-6):
        assert got.shape == want.shape and got.dtype == want.dtype
        assert jnp.allclose(got, want, atol=tol, rtol=tol)

    # Config 1: small module config (num_frames=6, dim=32), F < num_frames.
    num_frames, dim = 6, 32
    B, F, C, T, D = 2, 4, 2, 8, dim
    embedding = jax.random.normal(keys[0], (num_frames, 1, 1, dim), jnp.float32) / math.sqrt(dim)
    x = jax.random.normal(keys[1], (B, F, C, T, D), jnp.float32)
    gate_zero = jnp.zeros((1,), jnp.float32)
    gate_nz = jax.random.normal(keys[2], (1,), jnp.float32)

    out_u = jax.block_until_ready(mp_temporal_embedding(x, embedding, gated=False))
    check(out_u, _reference(x, embedding, gated=False))

    out_g0 = jax.block_until_ready(
        mp_temporal_embedding(x, embedding, gate=gate_zero, gated=True))
    check(out_g0, x)  # module's default gate init (0) -> identity

    out_g = jax.block_until_ready(
        mp_temporal_embedding(x, embedding, gate=gate_nz, gated=True))
    check(out_g, _reference(x, embedding, gate=gate_nz, gated=True))

    # Config 2: odd batch (B=3) -> single full-extent row block with a ragged
    # frame-period tail inside the kernel.
    x_odd = jax.random.normal(keys[3], (3, F, C, T, D), jnp.float32)
    out_odd = jax.block_until_ready(mp_temporal_embedding(x_odd, embedding, gated=False))
    check(out_odd, _reference(x_odd, embedding, gated=False))

    # Config 3: bf16 activations with f32 parameters -> promoted f32 output,
    # dtype-aware (16-row) sublane legality.
    x_bf16 = jax.random.normal(keys[4], (B, F, C, T, D), jnp.float32).astype(jnp.bfloat16)
    out_bf = jax.block_until_ready(
        mp_temporal_embedding(x_bf16, embedding, gate=gate_nz, gated=True))
    check(out_bf, _reference(x_bf16, embedding, gate=gate_nz, gated=True))

    # Config 4: larger slab -> folded batches, >= 2 row blocks, and the
    # in-kernel fori_loop broadcast path (block_rows // P > 8).
    num_frames2, dim2 = 8, 128
    B2, F2, C2, T2, D2 = 32, 8, 2, 8, dim2
    embedding_big = jax.random.normal(
        keys[5], (num_frames2, 1, 1, dim2), jnp.float32) / math.sqrt(dim2)
    x_big = jax.random.normal(keys[6], (B2, F2, C2, T2, D2), jnp.float32)
    out_big = jax.block_until_ready(
        mp_temporal_embedding(x_big, embedding_big, gated=False))
    check(out_big, _reference(x_big, embedding_big, gated=False))

    print("KERNEL_OK")
</pallas_src>

<mosaic_0001>
module attributes {stable_mosaic.version = 11 : i64} {
  func.func @kernel(%arg0: i32, %arg1: i32, %arg2: memref<8x512xf32, #tpu.memory_space<vmem>>, %arg3: memref<8x512xf32, #tpu.memory_space<vmem>>, %arg4: memref<8x512xf32, #tpu.memory_space<vmem>>) attributes {dimension_semantics = [#tpu.dimension_semantics<parallel>, #tpu.dimension_semantics<parallel>], iteration_bounds = array<i64: 1, 1>, scalar_prefetch = 0 : i64, scratch_operands = 0 : i64, tpu.core_type = #tpu.core_type<tc>, window_params = [{transform_indices = @transform_0, window_bounds = array<i64: 8, 512>}, {transform_indices = @transform_1, window_bounds = array<i64: 8, 512>}, {transform_indices = @transform_2, window_bounds = array<i64: 8, 512>}]} {
    %c0 = arith.constant 0 : index
    %c0_0 = arith.constant 0 : index
    %0 = vector.load %arg3[%c0, %c0_0] : memref<8x512xf32, #tpu.memory_space<vmem>>, vector<8x512xf32>
    %c0_i32 = arith.constant 0 : i32
    %1 = tpu.assume_multiple %c0_i32, 8 : i32
    %2 = arith.index_cast %1 : i32 to index
    %c0_1 = arith.constant 0 : index
    %3 = vector.load %arg2[%2, %c0_1] : memref<8x512xf32, #tpu.memory_space<vmem>>, vector<8x512xf32>
    %4 = arith.addf %3, %0 : vector<8x512xf32>
    %5 = arith.index_cast %1 : i32 to index
    %c0_2 = arith.constant 0 : index
    %6 = vector.load %arg4[%5, %c0_2] : memref<8x512xf32, #tpu.memory_space<vmem>>, vector<8x512xf32>
    tpu.vector_store %arg4[%5, %c0_2], %4 {strides = array<i32>} : memref<8x512xf32, #tpu.memory_space<vmem>>, vector<8x512xf32>,
    return
  }
  func.func @transform_0(%arg0: i32, %arg1: i32) -> (i32, i32) {
    %c0_i32 = arith.constant 0 : i32
    return %arg1, %arg0 : i32, i32
  }
  func.func @transform_1(%arg0: i32, %arg1: i32) -> (i32, i32) {
    %c0_i32 = arith.constant 0 : i32
    %c0_i32_0 = arith.constant 0 : i32
    return %c0_i32, %arg0 : i32, i32
  }
  func.func @transform_2(%arg0: i32, %arg1: i32) -> (i32, i32) {
    %c0_i32 = arith.constant 0 : i32
    return %arg1, %arg0 : i32, i32
  }
}

</mosaic_0001>

<llo_original>
// kernel: tpu_custom_call.1
$region0: #{tpu_custom_call.1}
  #allocation0 [shape = 'u32[]', space=smem, size = 0x4, offset = 0x4, fixed_abs, tag = 'smem constant byte address 0x4 - core index']
  #allocation1 [shape = 'u32[144,128]{1,0:T(1,128)}', space=vmem, size = 0x12000, scoped, tag = 'internal scratch']
  %s0 = inlined_call_operand.hbm [shape: f32[8,512], index: 0, kind: input, shape index: {}]
  %s1 = inlined_call_operand.hbm [shape: f32[8,512], index: 1, kind: input, shape index: {}]
  %s2 = inlined_call_operand.hbm [shape: f32[8,512], index: 2, kind: output, shape index: {}]
  %s3 = sld [smem:[#allocation0]]
  $region26: #{tpu_custom_call.1} parent=0
    _
  %s5 = ssub.s32 1, %s3
  %s6 = scalar_select 0, %s5, %s3
  $region1: #{tpu_custom_call.1} parent=0
    #allocation2 [shape = 'u8[16384]{0}', space=vmem, size = 0x4000, scoped, tag = 'input window, operand 0, single buffered']
    #allocation3 [shape = 's32[1]{0}', space=sflag, size = 0x4, scoped, tag = 'scoped memory for tpu_custom_call.1']
    #allocation4 [shape = 's32[1]{0}', space=sflag, size = 0x4, scoped, tag = 'scoped memory for tpu_custom_call.1']
    #allocation5 [shape = 'u8[16384]{0}', space=vmem, size = 0x4000, scoped, tag = 'input window, operand 1, single buffered']
    #allocation6 [shape = 's32[1]{0}', space=sflag, size = 0x4, scoped, tag = 'scoped memory for tpu_custom_call.1']
    #allocation7 [shape = 'u8[16384]{0}', space=vmem, size = 0x4000, scoped, tag = 'output window, operand 0, single buffered']
    %7 = vsyncpa [#allocation3], 0
    %8 = vsyncpa [#allocation6], 0
    %9 = vsyncpa [#allocation4], 0
    // Predicated region
    $region2: #{tpu_custom_call.1} parent=1 // pred_check
      _
    $region3: #{tpu_custom_call.1} parent=1 // pred_check_branch
      %11 = sbr.rel (0) target = $region5
    $region4: #{tpu_custom_call.1} parent=1 // pred_region
      %s13 = ssub.s32 512, 512
      %14 = vsyncadd [#allocation3], %s13
      %s16 = sshll.u32 [#allocation2], 4
      %s17 = int_to_ptr.vmem [resolvable:$true] %s16
      %19 = dma.hbm_to_vmem [thread:$0]  %s0, 512, %s17, [#allocation3]
    $region5: #{tpu_custom_call.1} parent=1 // pred_fallthru
      _
    // Predicated region
    $region6: #{tpu_custom_call.1} parent=1 // pred_check
      _
    $region7: #{tpu_custom_call.1} parent=1 // pred_check_branch
      %21 = sbr.rel (0) target = $region9
    $region8: #{tpu_custom_call.1} parent=1 // pred_region
      %s23 = ssub.s32 512, 512
      %24 = vsyncadd [#allocation6], %s23
      %s26 = sshll.u32 [#allocation5], 4
      %s27 = int_to_ptr.vmem [resolvable:$true] %s26
      %29 = dma.hbm_to_vmem [thread:$0]  %s1, 512, %s27, [#allocation6]
    $region9: #{tpu_custom_call.1} parent=1 // pred_fallthru
      _
    // Predicated region
    $region10: #{tpu_custom_call.1} parent=1 // pred_check
      _
    $region11: #{tpu_custom_call.1} parent=1 // pred_check_branch
      %31 = sbr.rel (0) target = $region13
    $region12: #{tpu_custom_call.1} parent=1 // pred_region
      %32 = dma.done [#allocation3], 512
    $region13: #{tpu_custom_call.1} parent=1 // pred_fallthru
      _
    // Predicated region
    $region14: #{tpu_custom_call.1} parent=1 // pred_check
      _
    $region15: #{tpu_custom_call.1} parent=1 // pred_check_branch
      %34 = sbr.rel (0) target = $region17
    $region16: #{tpu_custom_call.1} parent=1 // pred_region
      %35 = dma.done [#allocation6], 512
    $region17: #{tpu_custom_call.1} parent=1 // pred_fallthru
      _
    %v36 = vld [vmem:[#allocation5] sm:$0xff]
    %v37 = vld [vmem:[#allocation5 + $0x8] sm:$0xff]
    %v38 = vld [vmem:[#allocation5 + $0x10] sm:$0xff]
    %v39 = vld [vmem:[#allocation5 + $0x18] sm:$0xff]
    %s40 = smul.u32 0, 4
    %s41 = smul.addr %s40, 8
    %s42 = scalar_lea.vmem [#allocation2], %s41
    %v43 = vld [vmem:[%s42] sm:$0xff]
    %v44 = vld [vmem:[%s42 + $0x8] sm:$0xff]
    %v45 = vld [vmem:[%s42 + $0x10] sm:$0xff]
    %v46 = vld [vmem:[%s42 + $0x18] sm:$0xff]
    %v47 = vadd.f32 %v43, %v36
    %v48 = vadd.f32 %v44, %v37
    %v49 = vadd.f32 %v45, %v38
    %v50 = vadd.f32 %v46, %v39
    %s51 = smul.addr %s40, 8
    %s52 = scalar_lea.vmem [#allocation7], %s51
    %53 = vst [vmem:[%s52] sm:$0xff] %v47
    %54 = vst [vmem:[%s52 + $0x8] sm:$0xff] %v48
    %55 = vst [vmem:[%s52 + $0x10] sm:$0xff] %v49
    %56 = vst [vmem:[%s52 + $0x18] sm:$0xff] %v50
    // Predicated region
    $region18: #{tpu_custom_call.1} parent=1 // pred_check
      _
    $region19: #{tpu_custom_call.1} parent=1 // pred_check_branch
      %58 = sbr.rel (0) target = $region21
    $region20: #{tpu_custom_call.1} parent=1 // pred_region
      %s60 = ssub.s32 512, 512
      %61 = vsyncadd [#allocation4], %s60
      %s63 = sshll.u32 [#allocation7], 4
      %s64 = int_to_ptr.vmem [resolvable:$true] %s63
      %66 = dma.vmem_to_hbm [thread:$0]  %s64, 512, %s2, [#allocation4]
    $region21: #{tpu_custom_call.1} parent=1 // pred_fallthru
      _
    // Predicated region
    $region22: #{tpu_custom_call.1} parent=1 // pred_check
      _
    $region23: #{tpu_custom_call.1} parent=1 // pred_check_branch
      %68 = sbr.rel (0) target = $region25
    $region24: #{tpu_custom_call.1} parent=1 // pred_region
      %69 = dma.done [#allocation4], 512
    $region25: #{tpu_custom_call.1} parent=1 // pred_fallthru
      _
    %70 = vsyncpa [#allocation3], 1
    %71 = vsyncpa [#allocation6], 1
    %72 = vsyncpa [#allocation4], 1

</llo_original>
